<compile_context>
chip_gen: v6e
topology: v6e:2x2x1
jax: 0.10.0
libtpu: 0.0.40
codegen_flags: <defaults>
</compile_context>

<pallas_src>
import jax
import jax.numpy as jnp
from jax.experimental import pallas as pl
from jax.experimental.pallas import tpu as pltpu

_LANE = 128


def _round_up(n, m):
    return ((n + m - 1) // m) * m


def _pick_bm(B, block_rows):
    """Batch tile: large for overhead amortization, but >=2 grid steps when
    possible so v7x's two TensorCores both get work."""
    if B <= 8:
        return B                      # single tiny tile (sublane minimum anyway)
    half = _round_up((B + 1) // 2, 8)  # ceil(B/2) rounded to the sublane multiple
    return min(block_rows, half)


def _mlp_kernel(x_ref, w1_ref, b1_ref, w2_ref, b2_ref, w3_ref, b3_ref, o_ref):
    # x tile arrives f32; cast to bf16 in-kernel (free VPU cast, halves the
    # x-side HBM traffic vs. a wrapper-side astype pass).
    x = x_ref[...].astype(jnp.bfloat16)

    # fc1 + ReLU (bf16 MXU matmul, f32 accumulate, f32 elementwise)
    h1 = jnp.dot(x, w1_ref[...], preferred_element_type=jnp.float32) + b1_ref[...]
    h1 = jnp.maximum(h1, 0.0).astype(jnp.bfloat16)

    # fc2 + ReLU
    h2 = jnp.dot(h1, w2_ref[...], preferred_element_type=jnp.float32) + b2_ref[...]
    h2 = jnp.maximum(h2, 0.0).astype(jnp.bfloat16)

    # fc3. Padded output columns carry a -1e30 bias (baked in by prepare_params,
    # zero weight columns), so exp() drives them to 0 without an in-kernel mask.
    logits = jnp.dot(h2, w3_ref[...], preferred_element_type=jnp.float32) + b3_ref[...]

    # Numerically stable softmax along dim=1, exact normalization.
    m = jnp.max(logits, axis=1, keepdims=True)
    e = jnp.exp(logits - m)
    denom = jnp.sum(e, axis=1, keepdims=True)
    o_ref[...] = (e / denom).astype(o_ref.dtype)


def prepare_params(params):
    """One-time pad (lane-dense, multiples of 128) + bf16 cast of the weights.
    Run once at init; under jit this keeps the fused kernel the only consumer
    of weight bytes on every forward call."""
    w1, b1 = params["w1"], params["b1"]
    w2, b2 = params["w2"], params["b2"]
    w3, b3 = params["w3"], params["b3"]
    K, H1 = w1.shape
    H2, N = w3.shape
    H1p, H2p, Np = (_round_up(d, _LANE) for d in (H1, H2, N))

    def pad2(a, rows, cols, fill=0.0):
        return jnp.pad(a, ((0, rows - a.shape[0]), (0, cols - a.shape[1])),
                       constant_values=fill)

    # Zero padding is exact: padded hidden units get bias 0 -> ReLU 0 -> feed
    # zero rows of the next weight. Padded logit columns get a -1e30 bias so
    # they vanish under the softmax (replaces the old in-kernel mask).
    return {
        "w1": pad2(w1, K, H1p).astype(jnp.bfloat16),
        "b1": pad2(b1, 1, H1p).astype(jnp.float32),
        "w2": pad2(w2, H1p, H2p).astype(jnp.bfloat16),
        "b2": pad2(b2, 1, H2p).astype(jnp.float32),
        "w3": pad2(w3, H2p, Np).astype(jnp.bfloat16),
        "b3": pad2(b3, 1, Np, fill=-1e30).astype(jnp.float32),
        "out_size": N,
    }


def neural_net_forward(x, prepared, *, block_rows=1024, out_dtype=jnp.float32):
    """x: [B, input_size] float32. prepared: output of prepare_params."""
    w1, b1 = prepared["w1"], prepared["b1"]
    w2, b2 = prepared["w2"], prepared["b2"]
    w3, b3 = prepared["w3"], prepared["b3"]
    N = prepared["out_size"]

    B, K = x.shape
    H1p, H2p, Np = w1.shape[1], w2.shape[1], w3.shape[1]
    assert w1.shape[0] == K

    bm = _pick_bm(B, block_rows)
    Bp = _round_up(B, bm)
    # Ragged-tail fallback only: no extra HBM pass when bm divides B.
    xp = x if Bp == B else jnp.pad(x, ((0, Bp - B), (0, 0)))

    # Explicit VMEM budget: single-buffered resident weights + double-buffered
    # x / output tiles.  Keeps the tiling viable on v5e's 16 MiB default scoped
    # VMEM and stays within v7x's 64 MiB physical VMEM.
    out_bytes = jnp.dtype(out_dtype).itemsize
    vmem_budget = (
        2 * (K * H1p + H1p * H2p + H2p * Np)   # bf16 weights (single-buffered)
        + 4 * (H1p + H2p + Np)                 # f32 biases
        + 2 * bm * K * 4                       # double-buffered f32 x tiles
        + 2 * bm * Np * out_bytes)             # double-buffered output tiles
    vmem_limit = min(max(2 * vmem_budget + (2 << 20), 32 << 20), 64 << 20)

    const = lambda i: (0, 0)                   # weights stay VMEM-resident
    resident = dict(pipeline_mode=pl.Buffered(1))  # constant blocks: 1 buffer

    out = pl.pallas_call(
        _mlp_kernel,
        out_shape=jax.ShapeDtypeStruct((Bp, Np), out_dtype),
        grid=(Bp // bm,),
        in_specs=[
            pl.BlockSpec((bm, K), lambda i: (i, 0)),
            pl.BlockSpec((K, H1p), const, **resident),
            pl.BlockSpec((1, H1p), const, **resident),
            pl.BlockSpec((H1p, H2p), const, **resident),
            pl.BlockSpec((1, H2p), const, **resident),
            pl.BlockSpec((H2p, Np), const, **resident),
            pl.BlockSpec((1, Np), const, **resident),
        ],
        out_specs=pl.BlockSpec((bm, Np), lambda i: (i, 0)),
        compiler_params=pltpu.CompilerParams(
            dimension_semantics=("parallel",),
            vmem_limit_bytes=vmem_limit),
    )(xp, w1, b1, w2, b2, w3, b3)

    # Kernel stores a lane-dense padded slab (unmasked vst path); this slice to
    # the real [B, N] shape is the only wrapper-side copy.
    return out[:B, :N]


def init_params(key, input_size, hidden1, hidden2, output_size):
    """Deterministic init mimicking nn.Linear's U(-1/sqrt(fan_in), 1/sqrt(fan_in))."""
    ks = jax.random.split(key, 6)

    def linear(kw, kb, fan_in, fan_out):
        bound = 1.0 / jnp.sqrt(fan_in)
        w = jax.random.uniform(kw, (fan_in, fan_out), jnp.float32, -bound, bound)
        b = jax.random.uniform(kb, (1, fan_out), jnp.float32, -bound, bound)
        return w, b

    w1, b1 = linear(ks[0], ks[1], input_size, hidden1)
    w2, b2 = linear(ks[2], ks[3], hidden1, hidden2)
    w3, b3 = linear(ks[4], ks[5], hidden2, output_size)
    return {"w1": w1, "b1": b1, "w2": w2, "b2": b2, "w3": w3, "b3": b3}


def _reference_forward(x, params):
    h1 = jnp.maximum(x @ params["w1"] + params["b1"], 0.0)
    h2 = jnp.maximum(h1 @ params["w2"] + params["b2"], 0.0)
    logits = h2 @ params["w3"] + params["b3"]
    return jax.nn.softmax(logits, axis=1)


if __name__ == "__main__":
    key = jax.random.PRNGKey(0)
    k_x, k_p = jax.random.split(key)

    batch = 8
    input_size, hidden1, hidden2, output_size = 32, 64, 48, 16

    x = jax.random.normal(k_x, (batch, input_size), jnp.float32)
    params = init_params(k_p, input_size, hidden1, hidden2, output_size)
    prepared = prepare_params(params)   # pad + bf16 cast once, outside the hot path

    out = neural_net_forward(x, prepared)
    out = jax.block_until_ready(out)

    assert out.shape == (batch, output_size)
    # softmax rows sum to 1 (exact divide in-kernel)
    assert jnp.allclose(jnp.sum(out, axis=1), 1.0, atol=1e-3)
    # loose check vs f32 reference (bf16 MXU matmuls drift at ~1e-2)
    ref = _reference_forward(x, params)
    assert jnp.allclose(out, ref, atol=5e-2)

    print("KERNEL_OK")
</pallas_src>

<mosaic_0001>
module attributes {stable_mosaic.version = 11 : i64} {
  func.func @_mlp_kernel(%arg0: i32, %arg1: memref<8x32xf32, #tpu.memory_space<vmem>>, %arg2: memref<32x128xbf16, #tpu.memory_space<vmem>>, %arg3: memref<1x128xf32, #tpu.memory_space<vmem>>, %arg4: memref<128x128xbf16, #tpu.memory_space<vmem>>, %arg5: memref<1x128xf32, #tpu.memory_space<vmem>>, %arg6: memref<128x128xbf16, #tpu.memory_space<vmem>>, %arg7: memref<1x128xf32, #tpu.memory_space<vmem>>, %arg8: memref<8x128xf32, #tpu.memory_space<vmem>>) attributes {dimension_semantics = [#tpu.dimension_semantics<parallel>], iteration_bounds = array<i64: 1>, scalar_prefetch = 0 : i64, scratch_operands = 0 : i64, tpu.core_type = #tpu.core_type<tc>, window_params = [{transform_indices = @transform_0, window_bounds = array<i64: 8, 32>}, {pipeline_mode = #tpu.pipeline_mode<synchronous>, transform_indices = @transform_1, window_bounds = array<i64: 32, 128>}, {pipeline_mode = #tpu.pipeline_mode<synchronous>, transform_indices = @transform_2, window_bounds = array<i64: 1, 128>}, {pipeline_mode = #tpu.pipeline_mode<synchronous>, transform_indices = @transform_3, window_bounds = array<i64: 128, 128>}, {pipeline_mode = #tpu.pipeline_mode<synchronous>, transform_indices = @transform_4, window_bounds = array<i64: 1, 128>}, {pipeline_mode = #tpu.pipeline_mode<synchronous>, transform_indices = @transform_5, window_bounds = array<i64: 128, 128>}, {pipeline_mode = #tpu.pipeline_mode<synchronous>, transform_indices = @transform_6, window_bounds = array<i64: 1, 128>}, {transform_indices = @transform_7, window_bounds = array<i64: 8, 128>}]} {
    %c0 = arith.constant 0 : index
    %c0_0 = arith.constant 0 : index
    %0 = vector.load %arg1[%c0, %c0_0] : memref<8x32xf32, #tpu.memory_space<vmem>>, vector<8x32xf32>
    %1 = arith.truncf %0 : vector<8x32xf32> to vector<8x32xbf16>
    %c0_1 = arith.constant 0 : index
    %c0_2 = arith.constant 0 : index
    %2 = vector.load %arg2[%c0_1, %c0_2] : memref<32x128xbf16, #tpu.memory_space<vmem>>, vector<32x128xbf16>
    %cst = arith.constant dense<0.000000e+00> : vector<8x128xf32>
    %3 = tpu.matmul %1, %2, %cst {dimension_numbers = #tpu.dot_dimension_numbers<[1], [0], [0], [1], [0, 0, 1, 1], [], []>} : vector<8x32xbf16>, vector<32x128xbf16>, vector<8x128xf32> -> vector<8x128xf32>
    %c0_3 = arith.constant 0 : index
    %c0_4 = arith.constant 0 : index
    %4 = vector.load %arg3[%c0_3, %c0_4] : memref<1x128xf32, #tpu.memory_space<vmem>>, vector<1x128xf32>
    %5 = vector.broadcast %4 : vector<1x128xf32> to vector<8x128xf32>
    %6 = arith.addf %3, %5 : vector<8x128xf32>
    %cst_5 = arith.constant 0.000000e+00 : f32
    %7 = vector.broadcast %cst_5 : f32 to vector<8x128xf32>
    %8 = arith.maximumf %6, %7 : vector<8x128xf32>
    %9 = arith.truncf %8 : vector<8x128xf32> to vector<8x128xbf16>
    %c0_6 = arith.constant 0 : index
    %c0_7 = arith.constant 0 : index
    %10 = vector.load %arg4[%c0_6, %c0_7] : memref<128x128xbf16, #tpu.memory_space<vmem>>, vector<128x128xbf16>
    %cst_8 = arith.constant dense<0.000000e+00> : vector<8x128xf32>
    %11 = tpu.matmul %9, %10, %cst_8 {dimension_numbers = #tpu.dot_dimension_numbers<[1], [0], [0], [1], [0, 0, 1, 1], [], []>} : vector<8x128xbf16>, vector<128x128xbf16>, vector<8x128xf32> -> vector<8x128xf32>
    %c0_9 = arith.constant 0 : index
    %c0_10 = arith.constant 0 : index
    %12 = vector.load %arg5[%c0_9, %c0_10] : memref<1x128xf32, #tpu.memory_space<vmem>>, vector<1x128xf32>
    %13 = vector.broadcast %12 : vector<1x128xf32> to vector<8x128xf32>
    %14 = arith.addf %11, %13 : vector<8x128xf32>
    %cst_11 = arith.constant 0.000000e+00 : f32
    %15 = vector.broadcast %cst_11 : f32 to vector<8x128xf32>
    %16 = arith.maximumf %14, %15 : vector<8x128xf32>
    %17 = arith.truncf %16 : vector<8x128xf32> to vector<8x128xbf16>
    %c0_12 = arith.constant 0 : index
    %c0_13 = arith.constant 0 : index
    %18 = vector.load %arg6[%c0_12, %c0_13] : memref<128x128xbf16, #tpu.memory_space<vmem>>, vector<128x128xbf16>
    %cst_14 = arith.constant dense<0.000000e+00> : vector<8x128xf32>
    %19 = tpu.matmul %17, %18, %cst_14 {dimension_numbers = #tpu.dot_dimension_numbers<[1], [0], [0], [1], [0, 0, 1, 1], [], []>} : vector<8x128xbf16>, vector<128x128xbf16>, vector<8x128xf32> -> vector<8x128xf32>
    %c0_15 = arith.constant 0 : index
    %c0_16 = arith.constant 0 : index
    %20 = vector.load %arg7[%c0_15, %c0_16] : memref<1x128xf32, #tpu.memory_space<vmem>>, vector<1x128xf32>
    %21 = vector.broadcast %20 : vector<1x128xf32> to vector<8x128xf32>
    %22 = arith.addf %19, %21 : vector<8x128xf32>
    %cst_17 = arith.constant dense<0xFF800000> : vector<8xf32>
    %23 = vector.multi_reduction <maximumf>, %22, %cst_17 [1] : vector<8x128xf32> to vector<8xf32>
    %24 = vector.shape_cast %23 : vector<8xf32> to vector<8x1xf32>
    %25 = vector.broadcast %24 : vector<8x1xf32> to vector<8x128xf32>
    %26 = arith.subf %22, %25 : vector<8x128xf32>
    %27 = math.exp %26 : vector<8x128xf32>
    %cst_18 = arith.constant dense<0.000000e+00> : vector<8xf32>
    %28 = vector.multi_reduction <add>, %27, %cst_18 [1] : vector<8x128xf32> to vector<8xf32>
    %29 = vector.shape_cast %28 : vector<8xf32> to vector<8x1xf32>
    %30 = vector.broadcast %29 : vector<8x1xf32> to vector<8x128xf32>
    %31 = arith.divf %27, %30 : vector<8x128xf32>
    %c0_19 = arith.constant 0 : index
    %c0_20 = arith.constant 0 : index
    %32 = vector.load %arg8[%c0_19, %c0_20] : memref<8x128xf32, #tpu.memory_space<vmem>>, vector<8x128xf32>
    tpu.vector_store %arg8[%c0_19, %c0_20], %31 {strides = array<i32>} : memref<8x128xf32, #tpu.memory_space<vmem>>, vector<8x128xf32>,
    return
  }
  func.func @transform_0(%arg0: i32) -> (i32, i32) {
    %c0_i32 = arith.constant 0 : i32
    %c0_i32_0 = arith.constant 0 : i32
    return %arg0, %c0_i32 : i32, i32
  }
  func.func @transform_1(%arg0: i32) -> (i32, i32) {
    %c0_i32 = arith.constant 0 : i32
    %c0_i32_0 = arith.constant 0 : i32
    %c0_i32_1 = arith.constant 0 : i32
    return %c0_i32, %c0_i32_0 : i32, i32
  }
  func.func @transform_2(%arg0: i32) -> (i32, i32) {
    %c0_i32 = arith.constant 0 : i32
    %c0_i32_0 = arith.constant 0 : i32
    %c0_i32_1 = arith.constant 0 : i32
    return %c0_i32, %c0_i32_0 : i32, i32
  }
  func.func @transform_3(%arg0: i32) -> (i32, i32) {
    %c0_i32 = arith.constant 0 : i32
    %c0_i32_0 = arith.constant 0 : i32
    %c0_i32_1 = arith.constant 0 : i32
    return %c0_i32, %c0_i32_0 : i32, i32
  }
  func.func @transform_4(%arg0: i32) -> (i32, i32) {
    %c0_i32 = arith.constant 0 : i32
    %c0_i32_0 = arith.constant 0 : i32
    %c0_i32_1 = arith.constant 0 : i32
    return %c0_i32, %c0_i32_0 : i32, i32
  }
  func.func @transform_5(%arg0: i32) -> (i32, i32) {
    %c0_i32 = arith.constant 0 : i32
    %c0_i32_0 = arith.constant 0 : i32
    %c0_i32_1 = arith.constant 0 : i32
    return %c0_i32, %c0_i32_0 : i32, i32
  }
  func.func @transform_6(%arg0: i32) -> (i32, i32) {
    %c0_i32 = arith.constant 0 : i32
    %c0_i32_0 = arith.constant 0 : i32
    %c0_i32_1 = arith.constant 0 : i32
    return %c0_i32, %c0_i32_0 : i32, i32
  }
  func.func @transform_7(%arg0: i32) -> (i32, i32) {
    %c0_i32 = arith.constant 0 : i32
    %c0_i32_0 = arith.constant 0 : i32
    return %arg0, %c0_i32 : i32, i32
  }
}

</mosaic_0001>

<llo_original>
// kernel: tpu_custom_call.1
$region0: #{tpu_custom_call.1}
  #allocation0 [shape = 'u32[]', space=smem, size = 0x4, offset = 0x4, fixed_abs, tag = 'smem constant byte address 0x4 - core index']
  #allocation1 [shape = 'u32[144,128]{1,0:T(1,128)}', space=vmem, size = 0x12000, scoped, tag = 'internal scratch']
  %s0 = inlined_call_operand.hbm [shape: f32[8,32], index: 0, kind: input, shape index: {}]
  %s1 = inlined_call_operand.hbm [shape: bf16[32,128], index: 1, kind: input, shape index: {}]
  %s2 = inlined_call_operand.vmem [shape: f32[1,128], index: 2, kind: input, shape index: {}]
  %s3 = inlined_call_operand.hbm [shape: bf16[128,128], index: 3, kind: input, shape index: {}]
  %s4 = inlined_call_operand.vmem [shape: f32[1,128], index: 4, kind: input, shape index: {}]
  %s5 = inlined_call_operand.hbm [shape: bf16[128,128], index: 5, kind: input, shape index: {}]
  %s6 = inlined_call_operand.vmem [shape: f32[1,128], index: 6, kind: input, shape index: {}]
  %s7 = inlined_call_operand.hbm [shape: f32[8,128], index: 7, kind: output, shape index: {}]
  %s8 = sld [smem:[#allocation0]]
  $region54: #{tpu_custom_call.1} parent=0
    _
  %s10 = ssub.s32 1, %s8
  %s11 = scalar_select 0, %s10, %s8
  $region1: #{tpu_custom_call.1} parent=0
    #allocation2 [shape = 'u8[4096]{0}', space=vmem, size = 0x1000, scoped, tag = 'input window, operand 0, single buffered']
    #allocation3 [shape = 's32[1]{0}', space=sflag, size = 0x4, scoped, tag = 'scoped memory for tpu_custom_call.1']
    #allocation4 [shape = 's32[1]{0}', space=sflag, size = 0x4, scoped, tag = 'scoped memory for tpu_custom_call.1']
    #allocation5 [shape = 'u8[8192]{0}', space=vmem, size = 0x2000, scoped, tag = 'input window, operand 1, single buffered']
    #allocation6 [shape = 's32[1]{0}', space=sflag, size = 0x4, scoped, tag = 'scoped memory for tpu_custom_call.1']
    #allocation7 [shape = 'u8[32768]{0}', space=vmem, size = 0x8000, scoped, tag = 'input window, operand 3, single buffered']
    #allocation8 [shape = 'u8[32768]{0}', space=vmem, size = 0x8000, scoped, tag = 'input window, operand 5, single buffered']
    #allocation9 [shape = 's32[1]{0}', space=sflag, size = 0x4, scoped, tag = 'scoped memory for tpu_custom_call.1']
    #allocation10 [shape = 'u8[4096]{0}', space=vmem, size = 0x1000, scoped, tag = 'output window, operand 0, single buffered']
    %12 = vsyncpa [#allocation3], 0
    %13 = vsyncpa [#allocation6], 0
    %14 = vsyncpa [#allocation9], 0
    %15 = vsyncpa [#allocation4], 0
    // Predicated region
    $region2: #{tpu_custom_call.1} parent=1 // pred_check
      _
    $region3: #{tpu_custom_call.1} parent=1 // pred_check_branch
      %17 = sbr.rel (0) target = $region5
    $region4: #{tpu_custom_call.1} parent=1 // pred_region
      %s19 = ssub.s32 128, 128
      %20 = vsyncadd [#allocation3], %s19
      %s22 = sshll.u32 [#allocation2], 4
      %s23 = int_to_ptr.vmem [resolvable:$true] %s22
      %25 = dma.hbm_to_vmem [thread:$0]  %s0, 128, %s23, [#allocation3]
    $region5: #{tpu_custom_call.1} parent=1 // pred_fallthru
      _
    // Predicated region
    $region6: #{tpu_custom_call.1} parent=1 // pred_check
      _
    $region7: #{tpu_custom_call.1} parent=1 // pred_check_branch
      %27 = sbr.rel (0) target = $region9
    $region8: #{tpu_custom_call.1} parent=1 // pred_region
      %s29 = ssub.s32 256, 256
      %30 = vsyncadd [#allocation6], %s29
      %s31 = sshll.u32 [#allocation5], 4
      %s32 = int_to_ptr.vmem [resolvable:$true] %s31
      %37 = dma.hbm_to_vmem [thread:$0]  %s1, 256, %s32, [#allocation6], 64, 64, 4
    $region9: #{tpu_custom_call.1} parent=1 // pred_fallthru
      _
    // Predicated region
    $region10: #{tpu_custom_call.1} parent=1 // pred_check
      _
    $region11: #{tpu_custom_call.1} parent=1 // pred_check_branch
      %39 = sbr.rel (0) target = $region13
    $region12: #{tpu_custom_call.1} parent=1 // pred_region
      _
    $region13: #{tpu_custom_call.1} parent=1 // pred_fallthru
      _
    // Predicated region
    $region14: #{tpu_custom_call.1} parent=1 // pred_check
      _
    $region15: #{tpu_custom_call.1} parent=1 // pred_check_branch
      %41 = sbr.rel (0) target = $region17
    $region16: #{tpu_custom_call.1} parent=1 // pred_region
      %s43 = ssub.s32 1024, 1024
      %44 = vsyncadd [#allocation6], %s43
      %s45 = sshll.u32 [#allocation7], 4
      %s46 = int_to_ptr.vmem [resolvable:$true] %s45
      %51 = dma.hbm_to_vmem [thread:$0]  %s3, 1024, %s46, [#allocation6], 64, 64, 4
    $region17: #{tpu_custom_call.1} parent=1 // pred_fallthru
      _
    // Predicated region
    $region18: #{tpu_custom_call.1} parent=1 // pred_check
      _
    $region19: #{tpu_custom_call.1} parent=1 // pred_check_branch
      %53 = sbr.rel (0) target = $region21
    $region20: #{tpu_custom_call.1} parent=1 // pred_region
      _
    $region21: #{tpu_custom_call.1} parent=1 // pred_fallthru
      _
    // Predicated region
    $region22: #{tpu_custom_call.1} parent=1 // pred_check
      _
    $region23: #{tpu_custom_call.1} parent=1 // pred_check_branch
      %55 = sbr.rel (0) target = $region25
    $region24: #{tpu_custom_call.1} parent=1 // pred_region
      %s57 = ssub.s32 1024, 1024
      %58 = vsyncadd [#allocation9], %s57
      %s59 = sshll.u32 [#allocation8], 4
      %s60 = int_to_ptr.vmem [resolvable:$true] %s59
      %65 = dma.hbm_to_vmem [thread:$0]  %s5, 1024, %s60, [#allocation9], 64, 64, 4
    $region25: #{tpu_custom_call.1} parent=1 // pred_fallthru
      _
    // Predicated region
    $region26: #{tpu_custom_call.1} parent=1 // pred_check
      _
    $region27: #{tpu_custom_call.1} parent=1 // pred_check_branch
      %67 = sbr.rel (0) target = $region29
    $region28: #{tpu_custom_call.1} parent=1 // pred_region
      _
    $region29: #{tpu_custom_call.1} parent=1 // pred_fallthru
      _
    // Predicated region
    $region30: #{tpu_custom_call.1} parent=1 // pred_check
      _
    $region31: #{tpu_custom_call.1} parent=1 // pred_check_branch
      %69 = sbr.rel (0) target = $region33
    $region32: #{tpu_custom_call.1} parent=1 // pred_region
      %70 = dma.done [#allocation3], 128
    $region33: #{tpu_custom_call.1} parent=1 // pred_fallthru
      _
    // Predicated region
    $region34: #{tpu_custom_call.1} parent=1 // pred_check
      _
    $region35: #{tpu_custom_call.1} parent=1 // pred_check_branch
      %72 = sbr.rel (0) target = $region37
    $region36: #{tpu_custom_call.1} parent=1 // pred_region
      %73 = dma.done [#allocation6], 256
    $region37: #{tpu_custom_call.1} parent=1 // pred_fallthru
      _
    // Predicated region
    $region38: #{tpu_custom_call.1} parent=1 // pred_check
      _
    $region39: #{tpu_custom_call.1} parent=1 // pred_check_branch
      %75 = sbr.rel (0) target = $region41
    $region40: #{tpu_custom_call.1} parent=1 // pred_region
      %76 = dma.done [#allocation6], 1024
    $region41: #{tpu_custom_call.1} parent=1 // pred_fallthru
      _
    // Predicated region
    $region42: #{tpu_custom_call.1} parent=1 // pred_check
      _
    $region43: #{tpu_custom_call.1} parent=1 // pred_check_branch
      %78 = sbr.rel (0) target = $region45
    $region44: #{tpu_custom_call.1} parent=1 // pred_region
      %79 = dma.done [#allocation9], 1024
    $region45: #{tpu_custom_call.1} parent=1 // pred_fallthru
      _
    %v81 = vld [vmem:[#allocation2] sm:$0xff]
    %v82 = vpack.c.bf16 %v81, %v81
    %v83 = vld [vmem:[#allocation5] sm:$0xf]
    %v84 = vld [vmem:[#allocation5 + $0x4] sm:$0xf]
    %v85 = vld [vmem:[#allocation5 + $0x8] sm:$0xf]
    %v86 = vld [vmem:[#allocation5 + $0xc] sm:$0xf]
    %v87 = vld [vmem:[%s2] sm:$0x1]
    %v89 = vlaneseq
    %v90 = vshrl.u32 %v89, 7
    %v91 = vsub.s32 0, %v90
    %v92 = vrot.slane %v87, %v91
    %v98 = vunpack.c.l.b16 %v83
    %v99 = vunpack.c.l.b16 %v84
    %v100 = vunpack.c.l.b16 %v85
    %v101 = vunpack.c.l.b16 %v86
    %v102 = vpack.c.b16 %v99, %v98
    %v103 = vpack.c.b16 %v101, %v100
    %vm106 = vcmask 261120
    %v108 = vsel %vm106, %v82, 0
    %110 = vmatprep.subr.bf16.mxu0 0
    %111 = vmatpush1.bf16.msra.mxu0 0
    %112 = vmatprep.subr.bf16.mxu0 0
    %113 = vmatpush1.bf16.msra.mxu0 0
    %114 = vmatprep.subr.bf16.mxu0 0
    %115 = vmatpush1.bf16.msra.mxu0 0
    %116 = vmatprep.subr.bf16.mxu0 0
    %117 = vmatpush1.bf16.msra.mxu0 0
    %118 = vmatprep.subr.bf16.mxu0 0
    %119 = vmatpush1.bf16.msra.mxu0 0
    %120 = vmatprep.subr.bf16.mxu0 0
    %121 = vmatpush1.bf16.msra.mxu0 0
    %122 = vmatprep.subr.bf16.mxu0 0
    %123 = vmatpush1.bf16.msra.mxu0 %v103
    %124 = vmatprep.subr.bf16.mxu0 0
    %125 = vmatpush1.bf16.msra.mxu0 %v102
    %126 = vmatprep.subr.bf16.mxu0 0
    %127 = vmatpush2.bf16.msra.mxu0 0
    %128 = vmatprep.subr.bf16.mxu0 0
    %129 = vmatpush2.bf16.msra.mxu0 0
    %130 = vmatprep.subr.bf16.mxu0 0
    %131 = vmatpush2.bf16.msra.mxu0 0
    %132 = vmatprep.subr.bf16.mxu0 0
    %133 = vmatpush2.bf16.msra.mxu0 0
    %134 = vmatprep.subr.bf16.mxu0 0
    %135 = vmatpush2.bf16.msra.mxu0 0
    %136 = vmatprep.subr.bf16.mxu0 0
    %137 = vmatpush2.bf16.msra.mxu0 0
    %138 = vmatprep.subr.bf16.mxu0 0
    %139 = vmatpush2.bf16.msra.mxu0 0
    %140 = vmatprep.subr.bf16.mxu0 0
    %141 = vmatpush2.bf16.msra.mxu0 0
    %142 = vmatprep.mubr.bf16.mxu0 0
    %143 = vmatmul.mubr.bf16.gmra.mxu0 %v108
    %v144 = vpop.f32.mrf.mxu0
    %v145 = vadd.f32 %v92, %v144
    %v146 = vpop.f32.mrf.mxu0
    %v147 = vpop.f32.mrf.mxu0
    %v148 = vpop.f32.mrf.mxu0
    %149 = vdwg.mxu0
    %v150 = vmax.f32 %v145, 0.0
    %v151 = vpack.c.bf16 %v150, %v150
    %v152 = vld [vmem:[#allocation7] sm:$0xf]
    %v153 = vld [vmem:[#allocation7 + $0x4] sm:$0xf]
    %v154 = vld [vmem:[#allocation7 + $0x8] sm:$0xf]
    %v155 = vld [vmem:[#allocation7 + $0xc] sm:$0xf]
    %v156 = vld [vmem:[#allocation7 + $0x10] sm:$0xf]
    %v157 = vld [vmem:[#allocation7 + $0x14] sm:$0xf]
    %v158 = vld [vmem:[#allocation7 + $0x18] sm:$0xf]
    %v159 = vld [vmem:[#allocation7 + $0x1c] sm:$0xf]
    %v160 = vld [vmem:[#allocation7 + $0x20] sm:$0xf]
    %v161 = vld [vmem:[#allocation7 + $0x24] sm:$0xf]
    %v162 = vld [vmem:[#allocation7 + $0x28] sm:$0xf]
    %v163 = vld [vmem:[#allocation7 + $0x2c] sm:$0xf]
    %v164 = vld [vmem:[#allocation7 + $0x30] sm:$0xf]
    %v165 = vld [vmem:[#allocation7 + $0x34] sm:$0xf]
    %v166 = vld [vmem:[#allocation7 + $0x38] sm:$0xf]
    %v167 = vld [vmem:[#allocation7 + $0x3c] sm:$0xf]
    %v168 = vld [vmem:[%s4] sm:$0x1]
    %v170 = vlaneseq
    %v171 = vshrl.u32 %v170, 7
    %v172 = vsub.s32 0, %v171
    %v173 = vrot.slane %v168, %v172
    %v191 = vunpack.c.l.b16 %v152
    %v192 = vunpack.c.l.b16 %v153
    %v193 = vunpack.c.l.b16 %v154
    %v194 = vunpack.c.l.b16 %v155
    %v195 = vunpack.c.l.b16 %v156
    %v196 = vunpack.c.l.b16 %v157
    %v197 = vunpack.c.l.b16 %v158
    %v198 = vunpack.c.l.b16 %v159
    %v199 = vunpack.c.l.b16 %v160
    %v200 = vunpack.c.l.b16 %v161
    %v201 = vunpack.c.l.b16 %v162
    %v202 = vunpack.c.l.b16 %v163
    %v203 = vunpack.c.l.b16 %v164
    %v204 = vunpack.c.l.b16 %v165
    %v205 = vunpack.c.l.b16 %v166
    %v206 = vunpack.c.l.b16 %v167
    %v207 = vpack.c.b16 %v192, %v191
    %v208 = vpack.c.b16 %v194, %v193
    %v209 = vpack.c.b16 %v196, %v195
    %v210 = vpack.c.b16 %v198, %v197
    %v211 = vpack.c.b16 %v200, %v199
    %v212 = vpack.c.b16 %v202, %v201
    %v213 = vpack.c.b16 %v204, %v203
    %v214 = vpack.c.b16 %v206, %v205
    %223 = vmatprep.subr.bf16.mxu0 0
    %224 = vmatpush1.bf16.msra.mxu0 %v214
    %225 = vmatprep.subr.bf16.mxu0 0
    %226 = vmatpush1.bf16.msra.mxu0 %v213
    %227 = vmatprep.subr.bf16.mxu0 0
    %228 = vmatpush1.bf16.msra.mxu0 %v212
    %229 = vmatprep.subr.bf16.mxu0 0
    %230 = vmatpush1.bf16.msra.mxu0 %v211
    %231 = vmatprep.subr.bf16.mxu0 0
    %232 = vmatpush1.bf16.msra.mxu0 %v210
    %233 = vmatprep.subr.bf16.mxu0 0
    %234 = vmatpush1.bf16.msra.mxu0 %v209
    %235 = vmatprep.subr.bf16.mxu0 0
    %236 = vmatpush1.bf16.msra.mxu0 %v208
    %237 = vmatprep.subr.bf16.mxu0 0
    %238 = vmatpush1.bf16.msra.mxu0 %v207
    %239 = vmatprep.subr.bf16.mxu0 0
    %240 = vmatpush2.bf16.msra.mxu0 0
    %241 = vmatprep.subr.bf16.mxu0 0
    %242 = vmatpush2.bf16.msra.mxu0 0
    %243 = vmatprep.subr.bf16.mxu0 0
    %244 = vmatpush2.bf16.msra.mxu0 0
    %245 = vmatprep.subr.bf16.mxu0 0
    %246 = vmatpush2.bf16.msra.mxu0 0
    %247 = vmatprep.subr.bf16.mxu0 0
    %248 = vmatpush2.bf16.msra.mxu0 0
    %249 = vmatprep.subr.bf16.mxu0 0
    %250 = vmatpush2.bf16.msra.mxu0 0
    %251 = vmatprep.subr.bf16.mxu0 0
    %252 = vmatpush2.bf16.msra.mxu0 0
    %253 = vmatprep.subr.bf16.mxu0 0
    %254 = vmatpush2.bf16.msra.mxu0 0
    %255 = vmatprep.mubr.bf16.mxu0 0
    %256 = vmatmul.mubr.bf16.gmra.mxu0 %v151
    %v257 = vpop.f32.mrf.mxu0
    %v258 = vadd.f32 %v173, %v257
    %v259 = vpop.f32.mrf.mxu0
    %v260 = vpop.f32.mrf.mxu0
    %v261 = vpop.f32.mrf.mxu0
    %262 = vdwg.mxu0
    %v263 = vmax.f32 %v258, 0.0
    %v264 = vpack.c.bf16 %v263, %v263
    %v265 = vld [vmem:[#allocation8] sm:$0xf]
    %v266 = vld [vmem:[#allocation8 + $0x4] sm:$0xf]
    %v267 = vld [vmem:[#allocation8 + $0x8] sm:$0xf]
    %v268 = vld [vmem:[#allocation8 + $0xc] sm:$0xf]
    %v269 = vld [vmem:[#allocation8 + $0x10] sm:$0xf]
    %v270 = vld [vmem:[#allocation8 + $0x14] sm:$0xf]
    %v271 = vld [vmem:[#allocation8 + $0x18] sm:$0xf]
    %v272 = vld [vmem:[#allocation8 + $0x1c] sm:$0xf]
    %v273 = vld [vmem:[#allocation8 + $0x20] sm:$0xf]
    %v274 = vld [vmem:[#allocation8 + $0x24] sm:$0xf]
    %v275 = vld [vmem:[#allocation8 + $0x28] sm:$0xf]
    %v276 = vld [vmem:[#allocation8 + $0x2c] sm:$0xf]
    %v277 = vld [vmem:[#allocation8 + $0x30] sm:$0xf]
    %v278 = vld [vmem:[#allocation8 + $0x34] sm:$0xf]
    %v279 = vld [vmem:[#allocation8 + $0x38] sm:$0xf]
    %v280 = vld [vmem:[#allocation8 + $0x3c] sm:$0xf]
    %v281 = vld [vmem:[%s6] sm:$0x1]
    %v283 = vlaneseq
    %v284 = vshrl.u32 %v283, 7
    %v285 = vsub.s32 0, %v284
    %v286 = vrot.slane %v281, %v285
    %v304 = vunpack.c.l.b16 %v265
    %v305 = vunpack.c.l.b16 %v266
    %v306 = vunpack.c.l.b16 %v267
    %v307 = vunpack.c.l.b16 %v268
    %v308 = vunpack.c.l.b16 %v269
    %v309 = vunpack.c.l.b16 %v270
    %v310 = vunpack.c.l.b16 %v271
    %v311 = vunpack.c.l.b16 %v272
    %v312 = vunpack.c.l.b16 %v273
    %v313 = vunpack.c.l.b16 %v274
    %v314 = vunpack.c.l.b16 %v275
    %v315 = vunpack.c.l.b16 %v276
    %v316 = vunpack.c.l.b16 %v277
    %v317 = vunpack.c.l.b16 %v278
    %v318 = vunpack.c.l.b16 %v279
    %v319 = vunpack.c.l.b16 %v280
    %v320 = vpack.c.b16 %v305, %v304
    %v321 = vpack.c.b16 %v307, %v306
    %v322 = vpack.c.b16 %v309, %v308
    %v323 = vpack.c.b16 %v311, %v310
    %v324 = vpack.c.b16 %v313, %v312
    %v325 = vpack.c.b16 %v315, %v314
    %v326 = vpack.c.b16 %v317, %v316
    %v327 = vpack.c.b16 %v319, %v318
    %336 = vmatprep.subr.bf16.mxu0 0
    %337 = vmatpush1.bf16.msra.mxu0 %v327
    %338 = vmatprep.subr.bf16.mxu0 0
    %339 = vmatpush1.bf16.msra.mxu0 %v326
    %340 = vmatprep.subr.bf16.mxu0 0
    %341 = vmatpush1.bf16.msra.mxu0 %v325
    %342 = vmatprep.subr.bf16.mxu0 0
    %343 = vmatpush1.bf16.msra.mxu0 %v324
    %344 = vmatprep.subr.bf16.mxu0 0
    %345 = vmatpush1.bf16.msra.mxu0 %v323
    %346 = vmatprep.subr.bf16.mxu0 0
    %347 = vmatpush1.bf16.msra.mxu0 %v322
    %348 = vmatprep.subr.bf16.mxu0 0
    %349 = vmatpush1.bf16.msra.mxu0 %v321
    %350 = vmatprep.subr.bf16.mxu0 0
    %351 = vmatpush1.bf16.msra.mxu0 %v320
    %352 = vmatprep.subr.bf16.mxu0 0
    %353 = vmatpush2.bf16.msra.mxu0 0
    %354 = vmatprep.subr.bf16.mxu0 0
    %355 = vmatpush2.bf16.msra.mxu0 0
    %356 = vmatprep.subr.bf16.mxu0 0
    %357 = vmatpush2.bf16.msra.mxu0 0
    %358 = vmatprep.subr.bf16.mxu0 0
    %359 = vmatpush2.bf16.msra.mxu0 0
    %360 = vmatprep.subr.bf16.mxu0 0
    %361 = vmatpush2.bf16.msra.mxu0 0
    %362 = vmatprep.subr.bf16.mxu0 0
    %363 = vmatpush2.bf16.msra.mxu0 0
    %364 = vmatprep.subr.bf16.mxu0 0
    %365 = vmatpush2.bf16.msra.mxu0 0
    %366 = vmatprep.subr.bf16.mxu0 0
    %367 = vmatpush2.bf16.msra.mxu0 0
    %368 = vmatprep.mubr.bf16.mxu0 0
    %369 = vmatmul.mubr.bf16.gmra.mxu0 %v264
    %v370 = vpop.f32.mrf.mxu0
    %v371 = vadd.f32 %v286, %v370
    %v372 = vpop.f32.mrf.mxu0
    %v373 = vpop.f32.mrf.mxu0
    %v374 = vpop.f32.mrf.mxu0
    %375 = vdwg.mxu0
    %376 = vmax.xlane.f32.xlu0 %v371
    %v377 = vpop.xlane.xlu0 %376
    %v378 = vsub.f32 %v371, %v377
    %v379 = vmul.f32 %v378, 1.442695
    %v380 = vpow.pop %v379
    %381 = vadd.xlane.f32.xlu0 %v380
    %v382 = vpop.xlane.xlu0 %381
    %v383 = vrcp.pop %v382
    %v384 = vmul.f32 %v380, %v383
    %385 = vst [vmem:[#allocation10] sm:$0xff] %v384
    // Predicated region
    $region46: #{tpu_custom_call.1} parent=1 // pred_check
      _
    $region47: #{tpu_custom_call.1} parent=1 // pred_check_branch
      %387 = sbr.rel (0) target = $region49
    $region48: #{tpu_custom_call.1} parent=1 // pred_region
      %s389 = ssub.s32 128, 128
      %390 = vsyncadd [#allocation4], %s389
      %s392 = sshll.u32 [#allocation10], 4
      %s393 = int_to_ptr.vmem [resolvable:$true] %s392
      %395 = dma.vmem_to_hbm [thread:$0]  %s393, 128, %s7, [#allocation4]
    $region49: #{tpu_custom_call.1} parent=1 // pred_fallthru
      _
    // Predicated region
    $region50: #{tpu_custom_call.1} parent=1 // pred_check
      _
    $region51: #{tpu_custom_call.1} parent=1 // pred_check_branch
      %397 = sbr.rel (0) target = $region53
    $region52: #{tpu_custom_call.1} parent=1 // pred_region
      %398 = dma.done [#allocation4], 128
    $region53: #{tpu_custom_call.1} parent=1 // pred_fallthru
      _
    %399 = vsyncpa [#allocation3], 1
    %400 = vsyncpa [#allocation6], 1
    %401 = vsyncpa [#allocation9], 1
    %402 = vsyncpa [#allocation4], 1

</llo_original>
